<compile_context>
chip_gen: v5e
topology: v5e:2x2
jax: 0.10.0
libtpu: 0.0.40
codegen_flags: <defaults>
</compile_context>

<pallas_src>
import numpy as np
import jax
import jax.numpy as jnp
from jax.experimental import pallas as pl
from jax.experimental.pallas import tpu as pltpu


def haar_matrix(L: int, orthonormal: bool = True) -> np.ndarray:
    """Single-level Haar analysis matrix H (L, L).

    orthonormal=True  -> entries +-1/sqrt(2), H @ H.T = I (used by the reference)
    orthonormal=False -> entries in {+1, -1, 0}; the analysis*synthesis scale
                         1/2 is folded into the composed operator instead.
    DWT(x) = x @ H.T -> [approx (L/2) | detail (L/2)],   IDWT(z) = z @ H.
    """
    assert L % 2 == 0, "input_len must be even for a Haar level"
    v = 1.0 / np.sqrt(2.0) if orthonormal else 1.0
    H = np.zeros((L, L), dtype=np.float32)
    for k in range(L // 2):
        H[k, 2 * k] = v
        H[k, 2 * k + 1] = v
        H[L // 2 + k, 2 * k] = v
        H[L // 2 + k, 2 * k + 1] = -v
    return H


def wavelet_block_kernel(x_ref, t_ref, o_ref):
    """One row (batch) tile per grid step: out = x_tile @ T (single MXU matmul).

    x_ref : (TB, W*L)    input rows (each row is one flattened (W, L) sample)
    t_ref : (W*L, W*L)   composed DWT -> keep -> mix -> IDWT operator (resident)
    o_ref : (TB, W*L)    output rows
    """
    o_ref[...] = jnp.dot(x_ref[...], t_ref[...],
                         preferred_element_type=jnp.float32).astype(o_ref.dtype)


def _compose_operator(weights, input_len: int, keep: int, dtype):
    """T[(i,m),(o,l)] = sum_{k<keep} H[k,m] * w[i,o,k] * H[k,l], shape (W*L, W*L).

    Built once in the wrapper (plain XLA) from the {+1,-1,0} Haar rows; the
    exact analysis*synthesis scale 1/2 is folded in (power-of-two, exact)."""
    W = weights.shape[0]
    L, K = int(input_len), int(keep)
    Hk = jnp.asarray(haar_matrix(L, orthonormal=False)[:K, :])        # (K, L)
    w_fold = 0.5 * weights.astype(jnp.float32)                        # (W, W, K)
    T4 = jnp.einsum('km,iok,kl->imol', Hk, w_fold, Hk)                # (W, L, W, L)
    return T4.reshape(W * L, W * L).astype(dtype)


def _vmem_cap_bytes() -> int:
    """Generation-aware VMEM ceiling: <= 50% of physical VMEM (64 MiB on v7x,
    128 MiB on v5e/v6e), never below the 16 MiB v5e scoped default."""
    try:
        phys = int(pltpu.get_tpu_info().vmem_capacity_bytes)
    except Exception:
        phys = 64 << 20   # assume the smallest (v7x) if the query is unavailable
    return max(16 << 20, phys // 2)


def _choose_row_tile(B: int, row_bytes: int, *, target_bytes: int = 2 << 20,
                     min_steps: int = 8) -> int:
    """Pick the batch/row tile by BYTES (~2 MiB of input per grid step; the op
    is HBM-bandwidth bound), as a multiple of 8 sublanes, while keeping at
    least `min_steps` grid steps when the batch allows it (>= 2 steps per
    TensorCore on v7x so the pipeline can overlap DMA with compute)."""
    if B <= 8:
        return B                                     # single full-extent block
    tb = max(8, min(B, (target_bytes // max(row_bytes, 1)) // 8 * 8))
    if B >= min_steps * 8:
        tb = min(tb, max(8, (B // min_steps) // 8 * 8))
    return int(tb)


def wavelet_block1d(x, weights, keep, *, row_tile=None):
    """x: (B, width, input_len); weights: (width, width, keep)."""
    B, W, L = x.shape
    K = int(keep)
    assert weights.shape == (W, W, K)
    assert L % 2 == 0 and K <= L
    dt = x.dtype
    N = W * L
    itemsize = jnp.dtype(dt).itemsize

    # Composed operator (DWT -> keep -> channel mix -> IDWT) as one matrix.
    T = _compose_operator(weights, L, K, dt)                          # (N, N)
    t_bytes = N * N * itemsize
    # TODO(synk): for very large width*input_len (T > ~8 MiB) the composed
    # operator should be K/N-tiled (standard tiled matmul) or the mixing done
    # as a k-batched lax.dot_general; not needed at the sizes this block targets.
    assert t_bytes <= (8 << 20), "composed operator too large for resident path"

    # Lane-dense 2D working layout: (B, W*L). Contiguous reshapes are free.
    x2 = x.reshape(B, N)

    TB = int(row_tile) if row_tile is not None else _choose_row_tile(B, N * itemsize)
    grid = (pl.cdiv(B, TB),)

    # VMEM budget: double-buffered x/out row tiles + the resident operator
    # (double-buffered by default; small once composed) + slack, clamped to a
    # generation-aware cap.
    tile_bytes = TB * N * itemsize
    need = 4 * tile_bytes + 2 * t_bytes + (2 << 20)
    vmem_limit = int(min(max(need, 16 << 20), _vmem_cap_bytes()))

    out2 = pl.pallas_call(
        wavelet_block_kernel,
        out_shape=jax.ShapeDtypeStruct((B, N), dt),
        grid_spec=pltpu.PrefetchScalarGridSpec(
            num_scalar_prefetch=0,
            grid=grid,
            in_specs=[
                pl.BlockSpec((TB, N), lambda b: (b, 0)),   # x row tile
                pl.BlockSpec((N, N), lambda b: (0, 0)),    # composed operator
            ],
            out_specs=pl.BlockSpec((TB, N), lambda b: (b, 0)),
        ),
        compiler_params=pltpu.CompilerParams(
            dimension_semantics=("parallel",),
            vmem_limit_bytes=vmem_limit),
        cost_estimate=pl.CostEstimate(
            flops=2 * B * N * N,
            transcendentals=0,
            bytes_accessed=2 * B * N * itemsize + t_bytes),
    )(x2, T)

    return out2.reshape(B, W, L)


def wavelet_block1d_ref(x, weights, keep):
    """Plain-JAX reference mirroring the PyTorch forward."""
    B, W, L = x.shape
    H = jnp.asarray(haar_matrix(L, orthonormal=True))
    c = jnp.einsum('bil,kl->bik', x, H)                     # DWT: x @ H^T
    mixed = jnp.zeros_like(x).at[:, :, :keep].set(
        jnp.einsum('bix,iox->box', c[:, :, :keep], weights))
    out = jnp.einsum('bok,kl->bol', mixed, H)               # IDWT: z @ H
    return out


if __name__ == "__main__":
    # Small shapes consistent with the module.
    batch, width, input_len, keep = 2, 4, 16, 8

    key = jax.random.PRNGKey(0)
    kx, kw = jax.random.split(key)

    x = jax.random.normal(kx, (batch, width, input_len), dtype=jnp.float32)

    # Deterministic parameter init matching __init__: scale * rand(width, width, keep)
    scale = 1.0 / (width ** 2)
    weights = scale * jax.random.uniform(kw, (width, width, keep),
                                         dtype=jnp.float32)

    out = wavelet_block1d(x, weights, keep)
    out = jax.block_until_ready(out)

    ref = wavelet_block1d_ref(x, weights, keep)
    np.testing.assert_allclose(np.asarray(out), np.asarray(ref),
                               rtol=1e-5, atol=1e-5)

    print("KERNEL_OK")
</pallas_src>

<mosaic_0001>
module attributes {stable_mosaic.version = 11 : i64} {
  func.func @wavelet_block_kernel(%arg0: i32, %arg1: memref<2x64xf32, #tpu.memory_space<vmem>>, %arg2: memref<64x64xf32, #tpu.memory_space<vmem>>, %arg3: memref<2x64xf32, #tpu.memory_space<vmem>>) attributes {dimension_semantics = [#tpu.dimension_semantics<parallel>], iteration_bounds = array<i64: 1>, scalar_prefetch = 0 : i64, scratch_operands = 0 : i64, tpu.core_type = #tpu.core_type<tc>, window_params = [{transform_indices = @transform_0, window_bounds = array<i64: 2, 64>}, {pipeline_mode = #tpu.pipeline_mode<synchronous>, transform_indices = @transform_1, window_bounds = array<i64: 64, 64>}, {transform_indices = @transform_2, window_bounds = array<i64: 2, 64>}]} {
    %c0 = arith.constant 0 : index
    %c0_0 = arith.constant 0 : index
    %0 = vector.load %arg1[%c0, %c0_0] : memref<2x64xf32, #tpu.memory_space<vmem>>, vector<2x64xf32>
    %c0_1 = arith.constant 0 : index
    %c0_2 = arith.constant 0 : index
    %1 = vector.load %arg2[%c0_1, %c0_2] : memref<64x64xf32, #tpu.memory_space<vmem>>, vector<64x64xf32>
    %cst = arith.constant dense<0.000000e+00> : vector<2x64xf32>
    %2 = tpu.matmul %0, %1, %cst {dimension_numbers = #tpu.dot_dimension_numbers<[1], [0], [0], [1], [0, 0, 1, 1], [], []>} : vector<2x64xf32>, vector<64x64xf32>, vector<2x64xf32> -> vector<2x64xf32>
    %c0_3 = arith.constant 0 : index
    %c0_4 = arith.constant 0 : index
    %3 = vector.load %arg3[%c0_3, %c0_4] : memref<2x64xf32, #tpu.memory_space<vmem>>, vector<2x64xf32>
    tpu.vector_store %arg3[%c0_3, %c0_4], %2 {strides = array<i32>} : memref<2x64xf32, #tpu.memory_space<vmem>>, vector<2x64xf32>,
    return
  }
  func.func @transform_0(%arg0: i32) -> (i32, i32) {
    %c0_i32 = arith.constant 0 : i32
    %c0_i32_0 = arith.constant 0 : i32
    return %arg0, %c0_i32 : i32, i32
  }
  func.func @transform_1(%arg0: i32) -> (i32, i32) {
    %c0_i32 = arith.constant 0 : i32
    %c0_i32_0 = arith.constant 0 : i32
    %c0_i32_1 = arith.constant 0 : i32
    return %c0_i32, %c0_i32_0 : i32, i32
  }
  func.func @transform_2(%arg0: i32) -> (i32, i32) {
    %c0_i32 = arith.constant 0 : i32
    %c0_i32_0 = arith.constant 0 : i32
    return %arg0, %c0_i32 : i32, i32
  }
}

</mosaic_0001>

<llo_original>
// kernel: tpu_custom_call.1
$region0: #{tpu_custom_call.1}
  #allocation0 [shape = 'u32[]', space=smem, size = 0x4, offset = 0x4, fixed_abs, tag = 'smem constant byte address 0x4 - core index']
  #allocation1 [shape = 'u32[72,128]{1,0:T(1,128)}', space=vmem, size = 0x9000, scoped, tag = 'internal scratch']
  %s0 = inlined_call_operand.hbm [shape: f32[2,64], index: 0, kind: input, shape index: {}]
  %s1 = inlined_call_operand.hbm [shape: f32[64,64], index: 1, kind: input, shape index: {}]
  %s2 = inlined_call_operand.hbm [shape: f32[2,64], index: 2, kind: output, shape index: {}]
  %s3 = sld [smem:[#allocation0]]
  $region26: #{tpu_custom_call.1} parent=0
    _
  %s5 = ssub.s32 1, %s3
  %s6 = scalar_select 0, %s5, %s3
  $region1: #{tpu_custom_call.1} parent=0
    #allocation2 [shape = 'u8[1024]{0}', space=vmem, size = 0x400, scoped, tag = 'input window, operand 0, single buffered']
    #allocation3 [shape = 's32[1]{0}', space=sflag, size = 0x4, scoped, tag = 'scoped memory for tpu_custom_call.1']
    #allocation4 [shape = 's32[1]{0}', space=sflag, size = 0x4, scoped, tag = 'scoped memory for tpu_custom_call.1']
    #allocation5 [shape = 'u8[32768]{0}', space=vmem, size = 0x8000, scoped, tag = 'input window, operand 1, single buffered']
    #allocation6 [shape = 's32[1]{0}', space=sflag, size = 0x4, scoped, tag = 'scoped memory for tpu_custom_call.1']
    #allocation7 [shape = 'u8[1024]{0}', space=vmem, size = 0x400, scoped, tag = 'output window, operand 0, single buffered']
    %7 = vsyncpa [#allocation3], 0
    %8 = vsyncpa [#allocation6], 0
    %9 = vsyncpa [#allocation4], 0
    // Predicated region
    $region2: #{tpu_custom_call.1} parent=1 // pred_check
      _
    $region3: #{tpu_custom_call.1} parent=1 // pred_check_branch
      %11 = sbr.rel (0) target = $region5
    $region4: #{tpu_custom_call.1} parent=1 // pred_region
      %13 = vsyncadd [#allocation3], 0
      %s15 = sshll.u32 %s0, 4
      %s16 = int_to_ptr.hbm [resolvable:$true] %s15
      %s17 = sshll.u32 [#allocation2], 4
      %s18 = int_to_ptr.vmem [resolvable:$true] %s17
      %20 = dma.hbm_to_vmem [thread:$0]  %s16, 32, %s18, [#allocation3]
    $region5: #{tpu_custom_call.1} parent=1 // pred_fallthru
      _
    // Predicated region
    $region6: #{tpu_custom_call.1} parent=1 // pred_check
      _
    $region7: #{tpu_custom_call.1} parent=1 // pred_check_branch
      %22 = sbr.rel (0) target = $region9
    $region8: #{tpu_custom_call.1} parent=1 // pred_region
      %24 = vsyncadd [#allocation6], 0
      %s25 = sshll.u32 %s1, 4
      %s26 = int_to_ptr.hbm [resolvable:$true] %s25
      %s27 = sshll.u32 [#allocation5], 4
      %s28 = int_to_ptr.vmem [resolvable:$true] %s27
      %33 = dma.hbm_to_vmem [thread:$0]  %s26, 1024, %s28, [#allocation6], 128, 128, 8
    $region9: #{tpu_custom_call.1} parent=1 // pred_fallthru
      _
    // Predicated region
    $region10: #{tpu_custom_call.1} parent=1 // pred_check
      _
    $region11: #{tpu_custom_call.1} parent=1 // pred_check_branch
      %35 = sbr.rel (0) target = $region13
    $region12: #{tpu_custom_call.1} parent=1 // pred_region
      %37 = dma.done [#allocation3], 32
    $region13: #{tpu_custom_call.1} parent=1 // pred_fallthru
      _
    // Predicated region
    $region14: #{tpu_custom_call.1} parent=1 // pred_check
      _
    $region15: #{tpu_custom_call.1} parent=1 // pred_check_branch
      %39 = sbr.rel (0) target = $region17
    $region16: #{tpu_custom_call.1} parent=1 // pred_region
      %41 = dma.done [#allocation6], 1024
    $region17: #{tpu_custom_call.1} parent=1 // pred_fallthru
      _
    %v42 = vld [vmem:[#allocation2] sm:$0x3]
    %v43 = vld [vmem:[#allocation5] sm:$0xff]
    %v44 = vld [vmem:[#allocation5 + $0x8] sm:$0xff]
    %v45 = vld [vmem:[#allocation5 + $0x10] sm:$0xff]
    %v46 = vld [vmem:[#allocation5 + $0x18] sm:$0xff]
    %v47 = vld [vmem:[#allocation5 + $0x20] sm:$0xff]
    %v48 = vld [vmem:[#allocation5 + $0x28] sm:$0xff]
    %v49 = vld [vmem:[#allocation5 + $0x30] sm:$0xff]
    %v50 = vld [vmem:[#allocation5 + $0x38] sm:$0xff]
    %vm51 = vcmask 523264
    %v53 = vsel %vm51, %v42, 0
    %55 = vmatpush.msra.mxu0 0.0
    %56 = vmatpush.msra.mxu0 0.0
    %57 = vmatpush.msra.mxu0 0.0
    %58 = vmatpush.msra.mxu0 0.0
    %59 = vmatpush.msra.mxu0 0.0
    %60 = vmatpush.msra.mxu0 0.0
    %61 = vmatpush.msra.mxu0 0.0
    %62 = vmatpush.msra.mxu0 0.0
    %63 = vmatpush.msra.mxu0 %v50
    %64 = vmatpush.msra.mxu0 %v49
    %65 = vmatpush.msra.mxu0 %v48
    %66 = vmatpush.msra.mxu0 %v47
    %67 = vmatpush.msra.mxu0 %v46
    %68 = vmatpush.msra.mxu0 %v45
    %69 = vmatpush.msra.mxu0 %v44
    %70 = vmatpush.msra.mxu0 %v43
    %71 = vmatmul.f32.gmra.mxu0 %v53
    %v72 = vpop.f32.mrf.mxu0
    %v73 = vadd.f32 0.0, %v72
    %74 = vdwg.mxu0
    %vm75 = vcmask 517120
    %76 = vst.msk [vmem:[#allocation7] sm:$0x3] %vm75, %v73
    // Predicated region
    $region18: #{tpu_custom_call.1} parent=1 // pred_check
      _
    $region19: #{tpu_custom_call.1} parent=1 // pred_check_branch
      %78 = sbr.rel (0) target = $region21
    $region20: #{tpu_custom_call.1} parent=1 // pred_region
      %80 = vsyncadd [#allocation4], 0
      %s82 = sshll.u32 [#allocation7], 4
      %s83 = int_to_ptr.vmem [resolvable:$true] %s82
      %s84 = sshll.u32 %s2, 4
      %s85 = int_to_ptr.hbm [resolvable:$true] %s84
      %87 = dma.vmem_to_hbm [thread:$0]  %s83, 32, %s85, [#allocation4]
    $region21: #{tpu_custom_call.1} parent=1 // pred_fallthru
      _
    // Predicated region
    $region22: #{tpu_custom_call.1} parent=1 // pred_check
      _
    $region23: #{tpu_custom_call.1} parent=1 // pred_check_branch
      %89 = sbr.rel (0) target = $region25
    $region24: #{tpu_custom_call.1} parent=1 // pred_region
      %91 = dma.done [#allocation4], 32
    $region25: #{tpu_custom_call.1} parent=1 // pred_fallthru
      _
    %92 = vsyncpa [#allocation3], 1
    %93 = vsyncpa [#allocation6], 1
    %94 = vsyncpa [#allocation4], 1

</llo_original>
